<compile_context>
chip_gen: v6e
topology: v6e:2x2x1
jax: 0.10.0
libtpu: 0.0.40
codegen_flags: <defaults>
</compile_context>

<pallas_src>
import jax
import jax.numpy as jnp
from jax.experimental import pallas as pl
from jax.experimental.pallas import tpu as pltpu


def _conv_as_matmul_kernel(w_ref, b_ref, p_ref, o_ref):
    """out[n] = w @ p[n] + b  — one lane-dense 2-D matmul per image.

    w_ref : (C_out, K)      reshaped conv weight, K = C_in*KH*KW
    b_ref : (C_out, 1)      bias (broadcast along the lane axis)
    p_ref : (N, K, M)       transposed im2col patches, M = H_out*W_out
    o_ref : (N, C_out, M)   NCHW-contiguous output (reshape-only epilogue)
    """
    w = w_ref[...]
    b = b_ref[...]
    n_imgs = p_ref.shape[0]
    for n in range(n_imgs):  # static unroll: N is small and fully VMEM-resident
        acc = jnp.dot(w, p_ref[n], preferred_element_type=jnp.float32)  # (C_out, M)
        o_ref[n] = (acc + b).astype(o_ref.dtype)


@jax.jit
def conv2d_pallas(x_nchw, weight_oihw, bias):
    """Equivalent of nn.Conv2d(in_channels, out_channels, kernel_size)(x), stride=1, pad=0."""
    N, C_in, H, W = x_nchw.shape
    C_out, C_in_w, KH, KW = weight_oihw.shape
    assert C_in == C_in_w
    H_out, W_out = H - KH + 1, W - KW + 1
    M = H_out * W_out
    K = C_in * KH * KW

    # --- wrapper-side layout prep (tiny; compiles to one XLA fusion) -----------
    # Transposed im2col built directly from NCHW (no transposes anywhere):
    #   patches[n, c*KH*KW + kh*KW + kw, h*W_out + w] = x[n, c, h+kh, w+kw]
    taps = [
        x_nchw[:, :, kh:kh + H_out, kw:kw + W_out].reshape(N, C_in, M)
        for kh in range(KH) for kw in range(KW)
    ]
    patches = jnp.stack(taps, axis=2).reshape(N, K, M)     # (N, K, M)
    w2d = weight_oihw.reshape(C_out, K)                    # same (c, kh, kw) K-order
    b2d = bias.reshape(C_out, 1)

    out = pl.pallas_call(
        _conv_as_matmul_kernel,
        out_shape=jax.ShapeDtypeStruct((N, C_out, M), x_nchw.dtype),
        # Single invocation (no grid): whole problem lives in VMEM, so we pay no
        # per-grid-step pipeline overhead.  Re-derive tiling (grid over N / M) if
        # shapes ever grow beyond VMEM (64 MiB physical on v7x).
        in_specs=[
            pl.BlockSpec(memory_space=pltpu.MemorySpace.VMEM),
            pl.BlockSpec(memory_space=pltpu.MemorySpace.VMEM),
            pl.BlockSpec(memory_space=pltpu.MemorySpace.VMEM),
        ],
        out_specs=pl.BlockSpec(memory_space=pltpu.MemorySpace.VMEM),
    )(w2d, b2d, patches)

    # Epilogue: pure reshape (output lane axis is already NCHW-contiguous).
    return out.reshape(N, C_out, H_out, W_out)


def _reference_conv(x_nchw, weight_oihw, bias):
    out = jax.lax.conv_general_dilated(
        x_nchw, weight_oihw,
        window_strides=(1, 1), padding="VALID",
        dimension_numbers=("NCHW", "OIHW", "NCHW"),
    )
    return out + bias[None, :, None, None]


if __name__ == "__main__":
    # Shapes consistent with AtomicModel(kernel_size=3, in_channels=4, out_channels=8).
    N, C_in, H, W = 2, 4, 16, 16
    C_out, Ksz = 8, 3

    key = jax.random.PRNGKey(0)
    kx, kw_, kb = jax.random.split(key, 3)

    x = jax.random.normal(kx, (N, C_in, H, W), dtype=jnp.float32)

    # Deterministic init mimicking PyTorch Conv2d default (uniform in +/- 1/sqrt(fan_in)).
    fan_in = C_in * Ksz * Ksz
    bound = 1.0 / (fan_in ** 0.5)
    weight = jax.random.uniform(kw_, (C_out, C_in, Ksz, Ksz), jnp.float32, -bound, bound)
    bias = jax.random.uniform(kb, (C_out,), jnp.float32, -bound, bound)

    out = jax.block_until_ready(conv2d_pallas(x, weight, bias))
    ref = jax.block_until_ready(_reference_conv(x, weight, bias))

    assert out.shape == (N, C_out, H - Ksz + 1, W - Ksz + 1)
    assert jnp.allclose(out, ref, atol=1e-5, rtol=1e-5)

    print("KERNEL_OK")
</pallas_src>

<mosaic_0001>
module attributes {stable_mosaic.version = 11 : i64} {
  func.func @_conv_as_matmul_kernel(%arg0: memref<8x36xf32, #tpu.memory_space<vmem>>, %arg1: memref<8x1xf32, #tpu.memory_space<vmem>>, %arg2: memref<2x36x196xf32, #tpu.memory_space<vmem>>, %arg3: memref<2x8x196xf32, #tpu.memory_space<vmem>>) attributes {dimension_semantics = [], scalar_prefetch = 0 : i64, scratch_operands = 0 : i64, tpu.core_type = #tpu.core_type<tc>} {
    %c0 = arith.constant 0 : index
    %c0_0 = arith.constant 0 : index
    %0 = vector.load %arg0[%c0, %c0_0] : memref<8x36xf32, #tpu.memory_space<vmem>>, vector<8x36xf32>
    %c0_1 = arith.constant 0 : index
    %c0_2 = arith.constant 0 : index
    %1 = vector.load %arg1[%c0_1, %c0_2] : memref<8x1xf32, #tpu.memory_space<vmem>>, vector<8x1xf32>
    %c0_3 = arith.constant 0 : index
    %c0_4 = arith.constant 0 : index
    %c0_5 = arith.constant 0 : index
    %2 = vector.load %arg2[%c0_3, %c0_4, %c0_5] : memref<2x36x196xf32, #tpu.memory_space<vmem>>, vector<1x36x196xf32>
    %3 = vector.shape_cast %2 : vector<1x36x196xf32> to vector<36x196xf32>
    %cst = arith.constant dense<0.000000e+00> : vector<8x196xf32>
    %4 = tpu.matmul %0, %3, %cst {dimension_numbers = #tpu.dot_dimension_numbers<[1], [0], [0], [1], [0, 0, 1, 1], [], []>} : vector<8x36xf32>, vector<36x196xf32>, vector<8x196xf32> -> vector<8x196xf32>
    %5 = vector.broadcast %1 : vector<8x1xf32> to vector<8x196xf32>
    %6 = arith.addf %4, %5 : vector<8x196xf32>
    %c0_6 = arith.constant 0 : index
    %c0_7 = arith.constant 0 : index
    %c0_8 = arith.constant 0 : index
    %7 = vector.load %arg3[%c0_6, %c0_7, %c0_8] : memref<2x8x196xf32, #tpu.memory_space<vmem>>, vector<1x8x196xf32>
    %8 = vector.shape_cast %7 : vector<1x8x196xf32> to vector<8x196xf32>
    %9 = vector.shape_cast %6 : vector<8x196xf32> to vector<1x8x196xf32>
    tpu.vector_store %arg3[%c0_6, %c0_7, %c0_8], %9 {strides = array<i32>} : memref<2x8x196xf32, #tpu.memory_space<vmem>>, vector<1x8x196xf32>,
    %c1 = arith.constant 1 : index
    %c0_9 = arith.constant 0 : index
    %c0_10 = arith.constant 0 : index
    %10 = vector.load %arg2[%c1, %c0_9, %c0_10] : memref<2x36x196xf32, #tpu.memory_space<vmem>>, vector<1x36x196xf32>
    %11 = vector.shape_cast %10 : vector<1x36x196xf32> to vector<36x196xf32>
    %cst_11 = arith.constant dense<0.000000e+00> : vector<8x196xf32>
    %12 = tpu.matmul %0, %11, %cst_11 {dimension_numbers = #tpu.dot_dimension_numbers<[1], [0], [0], [1], [0, 0, 1, 1], [], []>} : vector<8x36xf32>, vector<36x196xf32>, vector<8x196xf32> -> vector<8x196xf32>
    %13 = vector.broadcast %1 : vector<8x1xf32> to vector<8x196xf32>
    %14 = arith.addf %12, %13 : vector<8x196xf32>
    %c1_12 = arith.constant 1 : index
    %c0_13 = arith.constant 0 : index
    %c0_14 = arith.constant 0 : index
    %15 = vector.load %arg3[%c1_12, %c0_13, %c0_14] : memref<2x8x196xf32, #tpu.memory_space<vmem>>, vector<1x8x196xf32>
    %16 = vector.shape_cast %15 : vector<1x8x196xf32> to vector<8x196xf32>
    %17 = vector.shape_cast %14 : vector<8x196xf32> to vector<1x8x196xf32>
    tpu.vector_store %arg3[%c1_12, %c0_13, %c0_14], %17 {strides = array<i32>} : memref<2x8x196xf32, #tpu.memory_space<vmem>>, vector<1x8x196xf32>,
    return
  }
}

</mosaic_0001>

<llo_original>
// kernel: conv2d_pallas.1
$region0: #{conv2d_pallas.1}
  #allocation0 [shape = 'u32[]', space=smem, size = 0x4, offset = 0x4, fixed_abs, tag = 'smem constant byte address 0x4 - core index']
  #allocation1 [shape = 'u32[144,128]{1,0:T(1,128)}', space=vmem, size = 0x12000, scoped, tag = 'internal scratch']
  %s0 = inlined_call_operand.vmem [shape: f32[8,36], index: 0, kind: input, shape index: {}]
  %s1 = inlined_call_operand.vmem [shape: f32[8,1], index: 1, kind: input, shape index: {}]
  %s2 = inlined_call_operand.vmem [shape: f32[2,36,196], index: 2, kind: input, shape index: {}]
  %s3 = inlined_call_operand.vmem [shape: f32[2,8,196], index: 3, kind: output, shape index: {}]
  %s4 = sld [smem:[#allocation0]]
  $region22: #{conv2d_pallas.1} parent=0
    _
  %s6 = ssub.s32 1, %s4
  %s7 = scalar_select 0, %s6, %s4
  // Predicated region
  $region2: #{conv2d_pallas.1} parent=0 // pred_check
    _
  $region3: #{conv2d_pallas.1} parent=0 // pred_check_branch
    %9 = sbr.rel (0) target = $region5
  $region4: #{conv2d_pallas.1} parent=0 // pred_region
    _
  $region5: #{conv2d_pallas.1} parent=0 // pred_fallthru
    _
  // Predicated region
  $region6: #{conv2d_pallas.1} parent=0 // pred_check
    _
  $region7: #{conv2d_pallas.1} parent=0 // pred_check_branch
    %11 = sbr.rel (0) target = $region9
  $region8: #{conv2d_pallas.1} parent=0 // pred_region
    _
  $region9: #{conv2d_pallas.1} parent=0 // pred_fallthru
    _
  // Predicated region
  $region10: #{conv2d_pallas.1} parent=0 // pred_check
    _
  $region11: #{conv2d_pallas.1} parent=0 // pred_check_branch
    %13 = sbr.rel (0) target = $region13
  $region12: #{conv2d_pallas.1} parent=0 // pred_region
    _
  $region13: #{conv2d_pallas.1} parent=0 // pred_fallthru
    _
  %v14 = vld [vmem:[%s0] sm:$0xff]
  %v15 = vld [vmem:[%s1] sm:$0xff]
  %v16 = vld [vmem:[%s2] sm:$0xff]
  %v17 = vld [vmem:[%s2 + $0x8] sm:$0xff]
  %v18 = vld [vmem:[%s2 + $0x10] sm:$0xff]
  %v19 = vld [vmem:[%s2 + $0x18] sm:$0xff]
  %v20 = vld [vmem:[%s2 + $0x20] sm:$0xff]
  %v21 = vld [vmem:[%s2 + $0x28] sm:$0xff]
  %v22 = vld [vmem:[%s2 + $0x30] sm:$0xff]
  %v23 = vld [vmem:[%s2 + $0x38] sm:$0xff]
  %v24 = vld [vmem:[%s2 + $0x40] sm:$0xf]
  %v25 = vld [vmem:[%s2 + $0x48] sm:$0xf]
  %27 = vset.pattern.permute.xlu0 0
  %28 = vperm.xlu0 %27, %v15
  %v29 = vpop.permute.xlu0 %28
  %vm31 = vcmask 293888
  %v33 = vsel %vm31, %v14, 0
  %vm35 = vcmask 1043456
  %v37 = vsel %vm35, %v24, 0
  %v40 = vsel %vm35, %v25, 0
  %42 = vmatprep.subr.mxu0 0.0
  %43 = vmatpush1.msra.mxu0 0.0
  %44 = vmatprep.subr.mxu0 0.0
  %45 = vmatpush1.msra.mxu0 0.0
  %46 = vmatprep.subr.mxu0 0.0
  %47 = vmatpush1.msra.mxu0 0.0
  %48 = vmatprep.subr.mxu0 0.0
  %49 = vmatpush1.msra.mxu0 0.0
  %50 = vmatprep.subr.mxu0 0.0
  %51 = vmatpush1.msra.mxu0 0.0
  %52 = vmatprep.subr.mxu0 0.0
  %53 = vmatpush1.msra.mxu0 0.0
  %54 = vmatprep.subr.mxu0 0.0
  %55 = vmatpush1.msra.mxu0 0.0
  %56 = vmatprep.subr.mxu0 0.0
  %57 = vmatpush1.msra.mxu0 0.0
  %58 = vmatprep.subr.mxu0 0.0
  %59 = vmatpush1.msra.mxu0 0.0
  %60 = vmatprep.subr.mxu0 0.0
  %61 = vmatpush1.msra.mxu0 0.0
  %62 = vmatprep.subr.mxu0 0.0
  %63 = vmatpush1.msra.mxu0 0.0
  %64 = vmatprep.subr.mxu0 %v40
  %65 = vmatpush1.msra.mxu0 %v37
  %66 = vmatprep.subr.mxu0 %v23
  %67 = vmatpush1.msra.mxu0 %v22
  %68 = vmatprep.subr.mxu0 %v21
  %69 = vmatpush1.msra.mxu0 %v20
  %70 = vmatprep.subr.mxu0 %v19
  %71 = vmatpush1.msra.mxu0 %v18
  %72 = vmatprep.subr.mxu0 %v17
  %73 = vmatpush1.msra.mxu0 %v16
  %74 = vmatprep.subr.mxu0 0.0
  %75 = vmatpush2.msra.mxu0 0.0
  %76 = vmatprep.subr.mxu0 0.0
  %77 = vmatpush2.msra.mxu0 0.0
  %78 = vmatprep.subr.mxu0 0.0
  %79 = vmatpush2.msra.mxu0 0.0
  %80 = vmatprep.subr.mxu0 0.0
  %81 = vmatpush2.msra.mxu0 0.0
  %82 = vmatprep.subr.mxu0 0.0
  %83 = vmatpush2.msra.mxu0 0.0
  %84 = vmatprep.subr.mxu0 0.0
  %85 = vmatpush2.msra.mxu0 0.0
  %86 = vmatprep.subr.mxu0 0.0
  %87 = vmatpush2.msra.mxu0 0.0
  %88 = vmatprep.subr.mxu0 0.0
  %89 = vmatpush2.msra.mxu0 0.0
  %90 = vmatprep.subr.mxu0 0.0
  %91 = vmatpush2.msra.mxu0 0.0
  %92 = vmatprep.subr.mxu0 0.0
  %93 = vmatpush2.msra.mxu0 0.0
  %94 = vmatprep.subr.mxu0 0.0
  %95 = vmatpush2.msra.mxu0 0.0
  %96 = vmatprep.subr.mxu0 0.0
  %97 = vmatpush2.msra.mxu0 0.0
  %98 = vmatprep.subr.mxu0 0.0
  %99 = vmatpush2.msra.mxu0 0.0
  %100 = vmatprep.subr.mxu0 0.0
  %101 = vmatpush2.msra.mxu0 0.0
  %102 = vmatprep.subr.mxu0 0.0
  %103 = vmatpush2.msra.mxu0 0.0
  %104 = vmatprep.subr.mxu0 0.0
  %105 = vmatpush2.msra.mxu0 0.0
  %106 = vmatprep.mubr.f32.mxu0 0.0
  %107 = vmatmul.mubr.f32.gmra.mxu0 %v33
  %v108 = vpop.f32.mrf.mxu0
  %v109 = vadd.f32 %v29, %v108
  %v110 = vpop.f32.mrf.mxu0
  %v111 = vadd.f32 %v29, %v110
  %112 = vdwg.mxu0
  %113 = vst [vmem:[%s3] sm:$0xff] %v109
  %vm114 = vcmask 556032
  %115 = vst.msk [vmem:[%s3 + $0x8] sm:$0xff] %vm114, %v111
  %s116 = scalar_lea.vmem %s2, 80
  %v117 = vld [vmem:[%s116] sm:$0xff]
  %v118 = vld [vmem:[%s116 + $0x8] sm:$0xff]
  %v119 = vld [vmem:[%s116 + $0x10] sm:$0xff]
  %v120 = vld [vmem:[%s116 + $0x18] sm:$0xff]
  %v121 = vld [vmem:[%s116 + $0x20] sm:$0xff]
  %v122 = vld [vmem:[%s116 + $0x28] sm:$0xff]
  %v123 = vld [vmem:[%s116 + $0x30] sm:$0xff]
  %v124 = vld [vmem:[%s116 + $0x38] sm:$0xff]
  %v125 = vld [vmem:[%s116 + $0x40] sm:$0xf]
  %v126 = vld [vmem:[%s116 + $0x48] sm:$0xf]
  %v128 = vsel %vm35, %v125, 0
  %v131 = vsel %vm35, %v126, 0
  %133 = vmatprep.subr.mxu0 0.0
  %134 = vmatpush1.msra.mxu0 0.0
  %135 = vmatprep.subr.mxu0 0.0
  %136 = vmatpush1.msra.mxu0 0.0
  %137 = vmatprep.subr.mxu0 0.0
  %138 = vmatpush1.msra.mxu0 0.0
  %139 = vmatprep.subr.mxu0 0.0
  %140 = vmatpush1.msra.mxu0 0.0
  %141 = vmatprep.subr.mxu0 0.0
  %142 = vmatpush1.msra.mxu0 0.0
  %143 = vmatprep.subr.mxu0 0.0
  %144 = vmatpush1.msra.mxu0 0.0
  %145 = vmatprep.subr.mxu0 0.0
  %146 = vmatpush1.msra.mxu0 0.0
  %147 = vmatprep.subr.mxu0 0.0
  %148 = vmatpush1.msra.mxu0 0.0
  %149 = vmatprep.subr.mxu0 0.0
  %150 = vmatpush1.msra.mxu0 0.0
  %151 = vmatprep.subr.mxu0 0.0
  %152 = vmatpush1.msra.mxu0 0.0
  %153 = vmatprep.subr.mxu0 0.0
  %154 = vmatpush1.msra.mxu0 0.0
  %155 = vmatprep.subr.mxu0 %v131
  %156 = vmatpush1.msra.mxu0 %v128
  %157 = vmatprep.subr.mxu0 %v124
  %158 = vmatpush1.msra.mxu0 %v123
  %159 = vmatprep.subr.mxu0 %v122
  %160 = vmatpush1.msra.mxu0 %v121
  %161 = vmatprep.subr.mxu0 %v120
  %162 = vmatpush1.msra.mxu0 %v119
  %163 = vmatprep.subr.mxu0 %v118
  %164 = vmatpush1.msra.mxu0 %v117
  %165 = vmatprep.subr.mxu0 0.0
  %166 = vmatpush2.msra.mxu0 0.0
  %167 = vmatprep.subr.mxu0 0.0
  %168 = vmatpush2.msra.mxu0 0.0
  %169 = vmatprep.subr.mxu0 0.0
  %170 = vmatpush2.msra.mxu0 0.0
  %171 = vmatprep.subr.mxu0 0.0
  %172 = vmatpush2.msra.mxu0 0.0
  %173 = vmatprep.subr.mxu0 0.0
  %174 = vmatpush2.msra.mxu0 0.0
  %175 = vmatprep.subr.mxu0 0.0
  %176 = vmatpush2.msra.mxu0 0.0
  %177 = vmatprep.subr.mxu0 0.0
  %178 = vmatpush2.msra.mxu0 0.0
  %179 = vmatprep.subr.mxu0 0.0
  %180 = vmatpush2.msra.mxu0 0.0
  %181 = vmatprep.subr.mxu0 0.0
  %182 = vmatpush2.msra.mxu0 0.0
  %183 = vmatprep.subr.mxu0 0.0
  %184 = vmatpush2.msra.mxu0 0.0
  %185 = vmatprep.subr.mxu0 0.0
  %186 = vmatpush2.msra.mxu0 0.0
  %187 = vmatprep.subr.mxu0 0.0
  %188 = vmatpush2.msra.mxu0 0.0
  %189 = vmatprep.subr.mxu0 0.0
  %190 = vmatpush2.msra.mxu0 0.0
  %191 = vmatprep.subr.mxu0 0.0
  %192 = vmatpush2.msra.mxu0 0.0
  %193 = vmatprep.subr.mxu0 0.0
  %194 = vmatpush2.msra.mxu0 0.0
  %195 = vmatprep.subr.mxu0 0.0
  %196 = vmatpush2.msra.mxu0 0.0
  %197 = vmatprep.mubr.f32.mxu0 0.0
  %198 = vmatmul.mubr.f32.gmra.mxu0 %v33
  %v199 = vpop.f32.mrf.mxu0
  %v200 = vadd.f32 %v29, %v199
  %v201 = vpop.f32.mrf.mxu0
  %v202 = vadd.f32 %v29, %v201
  %203 = vdwg.mxu0
  %s204 = scalar_lea.vmem %s3, 16
  %205 = vst [vmem:[%s204] sm:$0xff] %v200
  %206 = vst.msk [vmem:[%s204 + $0x8] sm:$0xff] %vm114, %v202
  // Predicated region
  $region14: #{conv2d_pallas.1} parent=0 // pred_check
    _
  $region15: #{conv2d_pallas.1} parent=0 // pred_check_branch
    %208 = sbr.rel (0) target = $region17
  $region16: #{conv2d_pallas.1} parent=0 // pred_region
    _
  $region17: #{conv2d_pallas.1} parent=0 // pred_fallthru
    _
  // Predicated region
  $region18: #{conv2d_pallas.1} parent=0 // pred_check
    _
  $region19: #{conv2d_pallas.1} parent=0 // pred_check_branch
    %210 = sbr.rel (0) target = $region21
  $region20: #{conv2d_pallas.1} parent=0 // pred_region
    _
  $region21: #{conv2d_pallas.1} parent=0 // pred_fallthru
    _

</llo_original>
